<compile_context>
chip_gen: v7x
topology: tpu7x:2x2x1
jax: 0.10.0
libtpu: 0.0.40
codegen_flags: <defaults>
</compile_context>

<pallas_src>
import functools

import jax
import jax.numpy as jnp
from jax.experimental import pallas as pl
from jax.experimental.pallas import tpu as pltpu


def _round_up(x, m):
    return (x + m - 1) // m * m


def _stem_kernel(x_ref, w_ref, shift_ref, o_ref, *, wh2, rows):
    # x_ref:     (C4p, Pim)       space-to-depth input: channels in sublanes,
    #                             flattened (Hh+1, Wh2) spatial in lanes (one image)
    # w_ref:     (4, Coutp, C4p)  per-shift weights (BN scale folded), resident
    # shift_ref: (Coutp, 1)       folded BN shift, resident
    # o_ref:     (Coutp, rows)    output: channels in sublanes, spatial in lanes
    coutp = o_ref.shape[0]
    acc = jnp.zeros((coutp, rows), jnp.float32)
    # The 3x3 stride-2 conv becomes 4 shifted windows (dh, dw) of the space-to-depth
    # input, each contracted over 4*Cin channels on the MXU.
    for t, (dh, dw) in enumerate(((0, 0), (0, 1), (1, 0), (1, 1))):
        off = dh * wh2 + dw                      # static lane offset
        acc = acc + jnp.dot(w_ref[t], x_ref[:, off:off + rows],
                            preferred_element_type=jnp.float32)
    y = acc + shift_ref[...]                     # lane-broadcast of (Coutp, 1)
    o_ref[...] = jnp.maximum(y, 0.0).astype(o_ref.dtype)


def mnasnet_stem(x_nchw, weight, gamma, beta, running_mean, running_var,
                 *, eps=1e-5):
    """Conv2d(3x3, stride 2, pad 1, no bias) + BatchNorm2d (running stats) + ReLU.

    x_nchw: (N, Cin, H, W); weight: (Cout, Cin, 3, 3) (torch layout).
    Returns NCHW output, matching the PyTorch module.
    """
    N, Cin, H, W = x_nchw.shape
    Cout = weight.shape[0]
    pad, k, stride = 1, 3, 2
    Ho = (H + 2 * pad - k) // stride + 1
    Wo = (W + 2 * pad - k) // stride + 1

    # ---- geometry of the space-to-depth grid --------------------------------
    Hpe = _round_up(H + 2 * pad, 2)
    Wpe = _round_up(W + 2 * pad, 2)
    Hh, Wh = Hpe // 2, Wpe // 2
    Hh1, Wh2 = Hh + 1, Wh + 1                   # +1 zero row/col so shifts stay in bounds

    C4 = 4 * Cin
    C4p = _round_up(C4, 8)                      # sublane multiple
    Coutp = _round_up(Cout, 8)

    R = Ho * Wh2                                # "wide" output rows per image (garbage cols)
    Rp = _round_up(R, 128)                      # lane-dense output width
    Pim = _round_up(max(Hh1 * Wh2, Wh2 + 1 + Rp), 128)

    # ---- glue: conv padding + space-to-depth (single pass over the input) ---
    xp = jnp.pad(x_nchw, ((0, 0), (0, 0),
                          (pad, 2 * Hh1 - H - pad), (pad, 2 * Wh2 - W - pad)))
    xp = xp.reshape(N, Cin, Hh1, 2, Wh2, 2)
    xp = jnp.transpose(xp, (0, 3, 5, 1, 2, 4))          # (N, ph, pw, Cin, h, w)
    xp = xp.reshape(N, C4, Hh1 * Wh2)
    xp = jnp.pad(xp, ((0, 0), (0, C4p - C4), (0, Pim - Hh1 * Wh2)))
    x_flat = xp.reshape(N * C4p, Pim)

    # ---- fold BatchNorm into the conv weight / shift ------------------------
    scale = gamma / jnp.sqrt(running_var + eps)         # (Cout,)
    shift = beta - running_mean * scale
    wsc = weight * scale[:, None, None, None]           # (Cout, Cin, 3, 3)
    wsc = jnp.pad(wsc, ((0, 0), (0, 0), (0, 1), (0, 1)))        # (Cout, Cin, 4, 4)
    wsc = wsc.reshape(Cout, Cin, 2, 2, 2, 2)            # (co, ci, dh, ph, dw, pw)
    w_taps = jnp.transpose(wsc, (2, 4, 0, 3, 5, 1)).reshape(4, Cout, C4)
    w_taps = jnp.pad(w_taps, ((0, 0), (0, Coutp - Cout), (0, C4p - C4)))
    shift_p = jnp.pad(shift, (0, Coutp - Cout)).reshape(Coutp, 1)

    # ---- Pallas call: grid over batch images (parallel -> megacore) ---------
    kernel = functools.partial(_stem_kernel, wh2=Wh2, rows=Rp)

    in_bytes = 4 * Pim * C4p
    out_bytes = 4 * Rp * Coutp
    w_bytes = 4 * (4 * Coutp * C4p + Coutp)
    vmem_limit = int(min(100 * 2 ** 20,
                         max(16 * 2 ** 20,
                             3 * in_bytes + 3 * out_bytes + 2 * w_bytes + (2 << 20))))
    cost = pl.CostEstimate(
        flops=2 * N * Coutp * Rp * 4 * C4p,
        transcendentals=0,
        bytes_accessed=N * (in_bytes + out_bytes) + w_bytes)

    out_flat = pl.pallas_call(
        kernel,
        out_shape=jax.ShapeDtypeStruct((N * Coutp, Rp), x_nchw.dtype),
        grid=(N,),
        in_specs=[
            pl.BlockSpec((C4p, Pim), lambda n: (n, 0)),           # per-image input
            pl.BlockSpec((4, Coutp, C4p), lambda n: (0, 0, 0)),   # resident weights
            pl.BlockSpec((Coutp, 1), lambda n: (0, 0)),           # resident shift
        ],
        out_specs=pl.BlockSpec((Coutp, Rp), lambda n: (n, 0)),
        compiler_params=pltpu.CompilerParams(
            dimension_semantics=("parallel",),
            vmem_limit_bytes=vmem_limit),
        cost_estimate=cost,
    )(x_flat, w_taps, shift_p)

    # ---- glue: strip padding columns; output is already NCHW-oriented -------
    out = out_flat.reshape(N, Coutp, Rp)[:, :Cout, :R]
    out = out.reshape(N, Cout, Ho, Wh2)[:, :, :, :Wo]
    return out


def _reference(x, weight, gamma, beta, mean, var, eps=1e-5):
    y = jax.lax.conv_general_dilated(
        x, weight, window_strides=(2, 2), padding=((1, 1), (1, 1)),
        dimension_numbers=("NCHW", "OIHW", "NCHW"))
    scale = (gamma / jnp.sqrt(var + eps))[None, :, None, None]
    shift = (beta - mean * gamma / jnp.sqrt(var + eps))[None, :, None, None]
    return jnp.maximum(y * scale + shift, 0.0)


if __name__ == "__main__":
    key = jax.random.PRNGKey(0)
    k_x, k_w, k_g, k_b, k_m, k_v = jax.random.split(key, 6)

    N, Cin, H, W = 2, 4, 16, 16
    Cout = 32

    x = jax.random.normal(k_x, (N, Cin, H, W), dtype=jnp.float32)
    weight = jax.random.normal(k_w, (Cout, Cin, 3, 3), dtype=jnp.float32) * 0.1
    gamma = jax.random.uniform(k_g, (Cout,), jnp.float32, 0.5, 1.5)
    beta = jax.random.normal(k_b, (Cout,), jnp.float32) * 0.1
    running_mean = jax.random.normal(k_m, (Cout,), jnp.float32) * 0.1
    running_var = jax.random.uniform(k_v, (Cout,), jnp.float32, 0.5, 1.5)

    fn = jax.jit(mnasnet_stem)
    out = fn(x, weight, gamma, beta, running_mean, running_var)
    jax.block_until_ready(out)

    assert out.shape == (N, Cout, H // 2, W // 2), out.shape

    ref = _reference(x, weight, gamma, beta, running_mean, running_var)
    max_err = jnp.max(jnp.abs(out - ref))
    assert jnp.allclose(out, ref, atol=1e-3, rtol=1e-3), f"max abs err {max_err}"

    print("KERNEL_OK")
</pallas_src>

<mosaic_0001>
module attributes {stable_mosaic.version = 11 : i64} {
  func.func @_stem_kernel(%arg0: i32, %arg1: memref<16x256xf32, #tpu.memory_space<vmem>>, %arg2: memref<4x32x16xf32, #tpu.memory_space<vmem>>, %arg3: memref<32x1xf32, #tpu.memory_space<vmem>>, %arg4: memref<32x128xf32, #tpu.memory_space<vmem>>) attributes {dimension_semantics = [#tpu.dimension_semantics<parallel>], iteration_bounds = array<i64: 2>, scalar_prefetch = 0 : i64, scratch_operands = 0 : i64, tpu.core_type = #tpu.core_type<tc>, window_params = [{transform_indices = @transform_0, window_bounds = array<i64: 16, 256>}, {pipeline_mode = #tpu.pipeline_mode<synchronous>, transform_indices = @transform_1, window_bounds = array<i64: 4, 32, 16>}, {pipeline_mode = #tpu.pipeline_mode<synchronous>, transform_indices = @transform_2, window_bounds = array<i64: 32, 1>}, {transform_indices = @transform_3, window_bounds = array<i64: 32, 128>}]} {
    %cst = arith.constant 0.000000e+00 : f32
    %0 = vector.broadcast %cst : f32 to vector<32x128xf32>
    %c0 = arith.constant 0 : index
    %c0_0 = arith.constant 0 : index
    %c0_1 = arith.constant 0 : index
    %1 = vector.load %arg2[%c0, %c0_0, %c0_1] : memref<4x32x16xf32, #tpu.memory_space<vmem>>, vector<1x32x16xf32>
    %2 = vector.shape_cast %1 : vector<1x32x16xf32> to vector<32x16xf32>
    %c0_2 = arith.constant 0 : index
    %c0_3 = arith.constant 0 : index
    %3 = vector.load %arg1[%c0_2, %c0_3] : memref<16x256xf32, #tpu.memory_space<vmem>>, vector<16x128xf32>
    %cst_4 = arith.constant dense<0.000000e+00> : vector<32x128xf32>
    %4 = tpu.matmul %2, %3, %cst_4 {dimension_numbers = #tpu.dot_dimension_numbers<[1], [0], [0], [1], [0, 0, 1, 1], [], []>} : vector<32x16xf32>, vector<16x128xf32>, vector<32x128xf32> -> vector<32x128xf32>
    %5 = arith.addf %0, %4 : vector<32x128xf32>
    %c1 = arith.constant 1 : index
    %c0_5 = arith.constant 0 : index
    %c0_6 = arith.constant 0 : index
    %6 = vector.load %arg2[%c1, %c0_5, %c0_6] : memref<4x32x16xf32, #tpu.memory_space<vmem>>, vector<1x32x16xf32>
    %7 = vector.shape_cast %6 : vector<1x32x16xf32> to vector<32x16xf32>
    %c0_7 = arith.constant 0 : index
    %c1_8 = arith.constant 1 : index
    %8 = vector.load %arg1[%c0_7, %c1_8] : memref<16x256xf32, #tpu.memory_space<vmem>>, vector<16x128xf32>
    %cst_9 = arith.constant dense<0.000000e+00> : vector<32x128xf32>
    %9 = tpu.matmul %7, %8, %cst_9 {dimension_numbers = #tpu.dot_dimension_numbers<[1], [0], [0], [1], [0, 0, 1, 1], [], []>} : vector<32x16xf32>, vector<16x128xf32>, vector<32x128xf32> -> vector<32x128xf32>
    %10 = arith.addf %5, %9 : vector<32x128xf32>
    %c2 = arith.constant 2 : index
    %c0_10 = arith.constant 0 : index
    %c0_11 = arith.constant 0 : index
    %11 = vector.load %arg2[%c2, %c0_10, %c0_11] : memref<4x32x16xf32, #tpu.memory_space<vmem>>, vector<1x32x16xf32>
    %12 = vector.shape_cast %11 : vector<1x32x16xf32> to vector<32x16xf32>
    %c0_12 = arith.constant 0 : index
    %c10 = arith.constant 10 : index
    %13 = vector.load %arg1[%c0_12, %c10] : memref<16x256xf32, #tpu.memory_space<vmem>>, vector<16x128xf32>
    %cst_13 = arith.constant dense<0.000000e+00> : vector<32x128xf32>
    %14 = tpu.matmul %12, %13, %cst_13 {dimension_numbers = #tpu.dot_dimension_numbers<[1], [0], [0], [1], [0, 0, 1, 1], [], []>} : vector<32x16xf32>, vector<16x128xf32>, vector<32x128xf32> -> vector<32x128xf32>
    %15 = arith.addf %10, %14 : vector<32x128xf32>
    %c3 = arith.constant 3 : index
    %c0_14 = arith.constant 0 : index
    %c0_15 = arith.constant 0 : index
    %16 = vector.load %arg2[%c3, %c0_14, %c0_15] : memref<4x32x16xf32, #tpu.memory_space<vmem>>, vector<1x32x16xf32>
    %17 = vector.shape_cast %16 : vector<1x32x16xf32> to vector<32x16xf32>
    %c0_16 = arith.constant 0 : index
    %c11 = arith.constant 11 : index
    %18 = vector.load %arg1[%c0_16, %c11] : memref<16x256xf32, #tpu.memory_space<vmem>>, vector<16x128xf32>
    %cst_17 = arith.constant dense<0.000000e+00> : vector<32x128xf32>
    %19 = tpu.matmul %17, %18, %cst_17 {dimension_numbers = #tpu.dot_dimension_numbers<[1], [0], [0], [1], [0, 0, 1, 1], [], []>} : vector<32x16xf32>, vector<16x128xf32>, vector<32x128xf32> -> vector<32x128xf32>
    %20 = arith.addf %15, %19 : vector<32x128xf32>
    %c0_18 = arith.constant 0 : index
    %c0_19 = arith.constant 0 : index
    %21 = vector.load %arg3[%c0_18, %c0_19] : memref<32x1xf32, #tpu.memory_space<vmem>>, vector<32x1xf32>
    %22 = vector.broadcast %21 : vector<32x1xf32> to vector<32x128xf32>
    %23 = arith.addf %20, %22 : vector<32x128xf32>
    %cst_20 = arith.constant 0.000000e+00 : f32
    %24 = vector.broadcast %cst_20 : f32 to vector<32x128xf32>
    %25 = arith.maximumf %23, %24 : vector<32x128xf32>
    %c0_21 = arith.constant 0 : index
    %c0_22 = arith.constant 0 : index
    %26 = vector.load %arg4[%c0_21, %c0_22] : memref<32x128xf32, #tpu.memory_space<vmem>>, vector<32x128xf32>
    tpu.vector_store %arg4[%c0_21, %c0_22], %25 {strides = array<i32>} : memref<32x128xf32, #tpu.memory_space<vmem>>, vector<32x128xf32>,
    return
  }
  func.func @transform_0(%arg0: i32) -> (i32, i32) {
    %c0_i32 = arith.constant 0 : i32
    %c0_i32_0 = arith.constant 0 : i32
    return %arg0, %c0_i32 : i32, i32
  }
  func.func @transform_1(%arg0: i32) -> (i32, i32, i32) {
    %c0_i32 = arith.constant 0 : i32
    %c0_i32_0 = arith.constant 0 : i32
    %c0_i32_1 = arith.constant 0 : i32
    %c0_i32_2 = arith.constant 0 : i32
    return %c0_i32, %c0_i32_0, %c0_i32_1 : i32, i32, i32
  }
  func.func @transform_2(%arg0: i32) -> (i32, i32) {
    %c0_i32 = arith.constant 0 : i32
    %c0_i32_0 = arith.constant 0 : i32
    %c0_i32_1 = arith.constant 0 : i32
    return %c0_i32, %c0_i32_0 : i32, i32
  }
  func.func @transform_3(%arg0: i32) -> (i32, i32) {
    %c0_i32 = arith.constant 0 : i32
    %c0_i32_0 = arith.constant 0 : i32
    return %arg0, %c0_i32 : i32, i32
  }
}

</mosaic_0001>

<llo_original>
// kernel: mnasnet_stem.1
$region0: #{mnasnet_stem.1}
  #allocation0 [shape = 'u32[]', space=smem, size = 0x4, offset = 0x4, fixed_abs, tag = 'smem constant byte address 0x4 - core index']
  #allocation1 [shape = 'u32[144,128]{1,0:T(1,128)}', space=vmem, size = 0x12000, scoped, tag = 'internal scratch']
  %s0 = inlined_call_operand.vmem [shape: f32[32,256], index: 0, kind: input, shape index: {}]
  %s1 = inlined_call_operand.vmem [shape: f32[4,32,16], index: 1, kind: input, shape index: {}]
  %s2 = inlined_call_operand.vmem [shape: f32[32,1], index: 2, kind: input, shape index: {}]
  %s3 = inlined_call_operand.vmem [shape: f32[64,128], index: 3, kind: output, shape index: {}]
  %s4 = sld [smem:[#allocation0]]
  $region45: #{mnasnet_stem.1} parent=0
    _
  %s6 = ssub.s32 1, %s4
  %s7 = scalar_select 0, %s6, %s4
  loop: start=0, step=1, limit=4
  $region2: #{mnasnet_stem.1} parent=0 // loop_pre_header
    _
  $region3: #{mnasnet_stem.1} parent=0 // loop_header
    %s9 = sphi 0, %s13
    %p10 = scmp.ge.s32.totalorder %s9, 4
    %s19 = sphi 0, %s21
    %s22 = sphi 0, %s19
    %s23 = sphi 0, %s22
    %s39 = sphi 0, %s23
    %s43 = sphi 0, %s43
    %s45 = sphi 0, %s43
    %s46 = sphi 0, %s45
    %s60 = sphi 0, %s46
    %s64 = sphi 0, %s64
    %s66 = sphi 0, %s64
    %s67 = sphi 0, %s66
    %s81 = sphi 0, %s67
    %s87 = sphi 0, %s89
    %s90 = sphi 0, %s87
    %s91 = sphi 0, %s90
    %s107 = sphi 0, %s91
  $region4: #{mnasnet_stem.1} parent=0 // loop_header_branch
    %12 = sbr.rel (%p10) target = $region8
  $region5: #{mnasnet_stem.1} parent=0 // loop_body
    %s14 = ssub.s32 %s9, 1
    %s15 = ssub.s32 %s9, 2
    %s16 = sadd.s32 %s9, 1
    %s17 = ssub.s32 %s9, %s16
    %p18 = scmp.eq.s32.totalorder %s17, 0
    %s20 = sadd.s32 %s19, 1
    %s21 = scalar_select %p18, %s19, %s20
    %p24 = pneg %p18
    %p25 = scmp.eq.s32.totalorder %s9, 1
    %p26 = por %p24, %p25
    %p27 = scmp.ne.s32.totalorder %s19, %s22
    %p28 = scmp.eq.s32.totalorder %s9, 0
    %p29 = por %p27, %p28
    %p30 = scmp.ne.s32.totalorder %s19, %s22
    %p31 = scmp.eq.s32.totalorder %s14, 1
    %p32 = por %p30, %p31
    %p33 = scmp.ne.s32.totalorder %s22, %s23
    %p34 = scmp.eq.s32.totalorder %s14, 0
    %p35 = por %p33, %p34
    %p36 = scmp.ne.s32.totalorder %s22, %s23
    %p37 = scmp.eq.s32.totalorder %s15, 1
    %p38 = por %p36, %p37
    %p40 = scmp.ne.s32.totalorder %s23, %s39
    %p41 = scmp.eq.s32.totalorder %s15, 0
    %p42 = por %p40, %p41
    %s44 = sadd.s32 %s43, 1
    %p47 = scmp.eq.s32.totalorder %s9, 1
    %p48 = scmp.ne.s32.totalorder %s43, %s45
    %p49 = scmp.eq.s32.totalorder %s9, 0
    %p50 = por %p48, %p49
    %p51 = scmp.ne.s32.totalorder %s43, %s45
    %p52 = scmp.eq.s32.totalorder %s14, 1
    %p53 = por %p51, %p52
    %p54 = scmp.ne.s32.totalorder %s45, %s46
    %p55 = scmp.eq.s32.totalorder %s14, 0
    %p56 = por %p54, %p55
    %p57 = scmp.ne.s32.totalorder %s45, %s46
    %p58 = scmp.eq.s32.totalorder %s15, 1
    %p59 = por %p57, %p58
    %p61 = scmp.ne.s32.totalorder %s46, %s60
    %p62 = scmp.eq.s32.totalorder %s15, 0
    %p63 = por %p61, %p62
    %s65 = sadd.s32 %s64, 1
    %p68 = scmp.eq.s32.totalorder %s9, 1
    %p69 = scmp.ne.s32.totalorder %s64, %s66
    %p70 = scmp.eq.s32.totalorder %s9, 0
    %p71 = por %p69, %p70
    %p72 = scmp.ne.s32.totalorder %s64, %s66
    %p73 = scmp.eq.s32.totalorder %s14, 1
    %p74 = por %p72, %p73
    %p75 = scmp.ne.s32.totalorder %s66, %s67
    %p76 = scmp.eq.s32.totalorder %s14, 0
    %p77 = por %p75, %p76
    %p78 = scmp.ne.s32.totalorder %s66, %s67
    %p79 = scmp.eq.s32.totalorder %s15, 1
    %p80 = por %p78, %p79
    %p82 = scmp.ne.s32.totalorder %s67, %s81
    %p83 = scmp.eq.s32.totalorder %s15, 0
    %p84 = por %p82, %p83
    %s85 = ssub.s32 %s9, %s16
    %p86 = scmp.eq.s32.totalorder %s85, 0
    %s88 = sadd.s32 %s87, 1
    %s89 = scalar_select %p86, %s87, %s88
    %p92 = pneg %p86
    %p93 = scmp.eq.s32.totalorder %s9, 1
    %p94 = por %p92, %p93
    %p95 = scmp.ne.s32.totalorder %s87, %s90
    %p96 = scmp.eq.s32.totalorder %s9, 0
    %p97 = por %p95, %p96
    %p98 = scmp.ne.s32.totalorder %s87, %s90
    %p99 = scmp.eq.s32.totalorder %s14, 1
    %p100 = por %p98, %p99
    %p101 = scmp.ne.s32.totalorder %s90, %s91
    %p102 = scmp.eq.s32.totalorder %s14, 0
    %p103 = por %p101, %p102
    %p104 = scmp.ne.s32.totalorder %s90, %s91
    %p105 = scmp.eq.s32.totalorder %s15, 1
    %p106 = por %p104, %p105
    %p108 = scmp.ne.s32.totalorder %s91, %s107
    %p109 = scmp.eq.s32.totalorder %s15, 0
    %p110 = por %p108, %p109
    %p111 = scmp.le.s32.totalorder 1, %s9
    %p112 = scmp.lt.s32.totalorder %s9, 3
    %p113 = pnand %p111, %p112
    %p114 = pneg %p113
    // Predicated region
    $region9: #{mnasnet_stem.1} parent=5 // pred_check
      _
    $region10: #{mnasnet_stem.1} parent=5 // pred_check_branch
      %116 = sbr.rel (%p113) target = $region12
    $region11: #{mnasnet_stem.1} parent=5 // pred_region
      %s117 = ssub.s32 %s9, 1
      // Predicated region
      $region13: #{mnasnet_stem.1} parent=11 // pred_check
        %p118 = pneg %p56
      $region14: #{mnasnet_stem.1} parent=11 // pred_check_branch
        %120 = sbr.rel (%p118) target = $region16
      $region15: #{mnasnet_stem.1} parent=11 // pred_region
        _
      $region16: #{mnasnet_stem.1} parent=11 // pred_fallthru
        _
      // Predicated region
      $region17: #{mnasnet_stem.1} parent=11 // pred_check
        %p121 = pneg %p77
      $region18: #{mnasnet_stem.1} parent=11 // pred_check_branch
        %123 = sbr.rel (%p121) target = $region20
      $region19: #{mnasnet_stem.1} parent=11 // pred_region
        _
      $region20: #{mnasnet_stem.1} parent=11 // pred_fallthru
        _
    $region12: #{mnasnet_stem.1} parent=5 // pred_fallthru
      _
    %p124 = scmp.lt.s32.totalorder %s9, 2
    // Predicated region
    $region21: #{mnasnet_stem.1} parent=5 // pred_check
      %p125 = pneg %p124
    $region22: #{mnasnet_stem.1} parent=5 // pred_check_branch
      %127 = sbr.rel (%p125) target = $region24
    $region23: #{mnasnet_stem.1} parent=5 // pred_region
      // Predicated region
      $region25: #{mnasnet_stem.1} parent=23 // pred_check
        %p128 = pneg %p29
      $region26: #{mnasnet_stem.1} parent=23 // pred_check_branch
        %130 = sbr.rel (%p128) target = $region28
      $region27: #{mnasnet_stem.1} parent=23 // pred_region
        %s131 = smul.u32 2, %s9
        %p132 = scmp.lt.s32.totalorder %s131, 3
        %s133 = scalar_select %p132, %s131, 3
        %s134 = smul.addr %s133, 2
        %s135 = smul.addr %s134, 8
        %s136 = scalar_lea.vmem %s0, %s135
        %s137 = smul.u32 2, %s9
      $region28: #{mnasnet_stem.1} parent=23 // pred_fallthru
        _
    $region24: #{mnasnet_stem.1} parent=5 // pred_fallthru
      _
    %p138 = scmp.le.s32.totalorder 1, %s9
    %p139 = scmp.lt.s32.totalorder %s9, 3
    %p140 = pnand %p138, %p139
    %p141 = pneg %p140
    // Predicated region
    $region29: #{mnasnet_stem.1} parent=5 // pred_check
      _
    $region30: #{mnasnet_stem.1} parent=5 // pred_check_branch
      %143 = sbr.rel (%p140) target = $region32
    $region31: #{mnasnet_stem.1} parent=5 // pred_region
      %s144 = ssub.s32 %s9, 1
      %s145 = smul.u32 2, %s14
      %p146 = scmp.lt.s32.totalorder %s145, 3
      %s147 = scalar_select %p146, %s145, 3
      %s148 = smul.addr %s147, 2
      %s149 = smul.addr %s148, 8
      %s150 = scalar_lea.vmem %s0, %s149
      %p151 = pneg %p35
      %p152 = pneg %p32
      %p153 = pneg %p56
      %p154 = pneg %p53
      %p155 = pneg %p77
      %p156 = pneg %p74
      %p157 = pneg %p103
      %p158 = pneg %p100
      %s159 = smul.u32 4, %s14
      %p160 = scmp.lt.s32.totalorder %s159, 7
      %s161 = scalar_select %p160, %s159, 7
      %s162 = smul.addr %s161, 8
      %s163 = scalar_lea.vmem %s3, %s162
      %s164 = smul.u32 2, %s14
      %p165 = scmp.lt.s32.totalorder %s164, 3
      %s166 = scalar_select %p165, %s164, 3
      %s167 = smul.addr %s166, 2
      %s168 = smul.addr %s167, 8
      %s169 = scalar_lea.vmem %s0, %s168
      %s170 = smul.u32 2, %s14
      %s171 = smul.u32 4, %s14
      %p172 = scmp.lt.s32.totalorder %s171, 7
      %s173 = scalar_select %p172, %s171, 7
      %s174 = smul.addr %s173, 8
      %s175 = scalar_lea.vmem %s3, %s174
      %s176 = smul.u32 4, %s14
      %v177 = vld [vmem:[%s1] sm:$0xff]
      %v178 = vld [vmem:[%s1 + $0x8] sm:$0xff]
      %v179 = vld [vmem:[%s1 + $0x10] sm:$0xff]
      %v180 = vld [vmem:[%s1 + $0x18] sm:$0xff]
      %v181 = vld [vmem:[%s169] sm:$0xff]
      %v182 = vld [vmem:[%s169 + $0x10] sm:$0xff]
      %s183 = scalar_lea.vmem %s1, 32
      %v184 = vld [vmem:[%s183] sm:$0xff]
      %v185 = vld [vmem:[%s183 + $0x8] sm:$0xff]
      %v186 = vld [vmem:[%s183 + $0x10] sm:$0xff]
      %v187 = vld [vmem:[%s183 + $0x18] sm:$0xff]
      %v188 = vld [vmem:[%s169] sm:$0xff]
      %v189 = vld [vmem:[%s169 + $0x8] sm:$0xff]
      %v190 = vld [vmem:[%s169 + $0x10] sm:$0xff]
      %v191 = vld [vmem:[%s169 + $0x18] sm:$0xff]
      %196 = vrot.lane.b32.xlu0 %v188, 127
      %v197 = vpop.permute.xlu0 %196
      %198 = vrot.lane.b32.xlu0 %v189, 127
      %v199 = vpop.permute.xlu0 %198
      %200 = vrot.lane.b32.xlu0 %v190, 127
      %v201 = vpop.permute.xlu0 %200
      %202 = vrot.lane.b32.xlu0 %v191, 127
      %v203 = vpop.permute.xlu0 %202
      %vm204 = vcmask 1039360
      %v205 = vsel %vm204, %v197, %v199
      %v206 = vsel %vm204, %v201, %v203
      %vm209 = vcmask 130048
      %v211 = vsel %vm209, %v184, 0
      %v214 = vsel %vm209, %v185, 0
      %v217 = vsel %vm209, %v186, 0
      %v220 = vsel %vm209, %v187, 0
      %222 = vmatprep.subr.mxu0 0.0
      %223 = vmatpush1.msra.mxu0 %v205
      %224 = vmatprep.subr.mxu0 0.0
      %225 = vmatpush1.msra.mxu0 %v206
      %226 = vmatprep.subr.mxu0 0.0
      %227 = vmatpush1.msra.mxu0 0.0
      %228 = vmatprep.subr.mxu0 0.0
      %229 = vmatpush1.msra.mxu0 0.0
      %230 = vmatprep.subr.mxu0 0.0
      %231 = vmatpush1.msra.mxu0 0.0
      %232 = vmatprep.subr.mxu0 0.0
      %233 = vmatpush1.msra.mxu0 0.0
      %234 = vmatprep.subr.mxu0 0.0
      %235 = vmatpush1.msra.mxu0 0.0
      %236 = vmatprep.subr.mxu0 0.0
      %237 = vmatpush1.msra.mxu0 0.0
      %238 = vmatprep.subr.mxu0 0.0
      %239 = vmatpush1.msra.mxu0 0.0
      %240 = vmatprep.subr.mxu0 0.0
      %241 = vmatpush1.msra.mxu0 0.0
      %242 = vmatprep.subr.mxu0 0.0
      %243 = vmatpush1.msra.mxu0 0.0
      %244 = vmatprep.subr.mxu0 0.0
      %245 = vmatpush1.msra.mxu0 0.0
      %246 = vmatprep.subr.mxu0 0.0
      %247 = vmatpush1.msra.mxu0 0.0
      %248 = vmatprep.subr.mxu0 0.0
      %249 = vmatpush1.msra.mxu0 0.0
      %250 = vmatprep.subr.mxu0 0.0
      %251 = vmatpush1.msra.mxu0 0.0
      %252 = vmatprep.subr.mxu0 0.0
      %253 = vmatpush1.msra.mxu0 0.0
      %254 = vmatprep.subr.mxu0 0.0
      %255 = vmatpush1.msra.mxu0 0.0
      %256 = vmatprep.subr.mxu0 0.0
      %257 = vmatpush1.msra.mxu0 0.0
      %258 = vmatprep.subr.mxu0 0.0
      %259 = vmatpush1.msra.mxu0 0.0
      %260 = vmatprep.subr.mxu0 0.0
      %261 = vmatpush1.msra.mxu0 0.0
      %262 = vmatprep.subr.mxu0 0.0
      %263 = vmatpush1.msra.mxu0 0.0
      %264 = vmatprep.subr.mxu0 0.0
      %265 = vmatpush1.msra.mxu0 0.0
      %266 = vmatprep.subr.mxu0 0.0
      %267 = vmatpush1.msra.mxu0 0.0
      %268 = vmatprep.subr.mxu0 0.0
      %269 = vmatpush1.msra.mxu0 0.0
      %270 = vmatprep.subr.mxu0 0.0
      %271 = vmatpush1.msra.mxu0 0.0
      %272 = vmatprep.subr.mxu0 0.0
      %273 = vmatpush1.msra.mxu0 0.0
      %274 = vmatprep.subr.mxu0 0.0
      %275 = vmatpush1.msra.mxu0 0.0
      %276 = vmatprep.subr.mxu0 0.0
      %277 = vmatpush1.msra.mxu0 0.0
      %278 = vmatprep.subr.mxu0 0.0
      %279 = vmatpush1.msra.mxu0 0.0
      %280 = vmatprep.subr.mxu0 0.0
      %281 = vmatpush1.msra.mxu0 0.0
      %282 = vmatprep.subr.mxu0 0.0
      %283 = vmatpush1.msra.mxu0 0.0
      %284 = vmatprep.subr.mxu0 0.0
      %285 = vmatpush1.msra.mxu0 0.0
      %286 = vmatprep.mubr.f32.mxu0 0.0
      %287 = vmatmul.mubr.f32.gmra.mrb[0].mxu0 %v211
      %v288 = vpop.f32.mrb[0].mxu0
      %v289 = vadd.f32 0.0, %v288
      %v290 = vpop.f32.mrb[0].mxu0
      %291 = vmatprep.mubr.f32.mxu0 0.0
      %292 = vmatmul.mubr.f32.gmra.mrb[0].mxu0 %v214
      %v293 = vpop.f32.mrb[0].mxu0
      %v294 = vadd.f32 0.0, %v293
      %v295 = vpop.f32.mrb[0].mxu0
      %296 = vmatprep.mubr.f32.mxu0 0.0
      %297 = vmatmul.mubr.f32.gmra.mrb[0].mxu0 %v217
      %v298 = vpop.f32.mrb[0].mxu0
      %v299 = vadd.f32 0.0, %v298
      %v300 = vpop.f32.mrb[0].mxu0
      %301 = vmatprep.mubr.f32.mxu0 0.0
      %302 = vmatmul.mubr.f32.gmra.mrb[0].mxu0 %v220
      %v303 = vpop.f32.mrb[0].mxu0
      %v304 = vadd.f32 0.0, %v303
      %v305 = vpop.f32.mrb[0].mxu0
      %306 = vdwg.mxu0
      %v308 = vsel %vm209, %v177, 0
      %v311 = vsel %vm209, %v178, 0
      %v314 = vsel %vm209, %v179, 0
      %v317 = vsel %vm209, %v180, 0
      %319 = vmatprep.subr.mxu0 0.0
      %320 = vmatpush1.msra.mxu0 %v181
      %321 = vmatprep.subr.mxu0 0.0
      %322 = vmatpush1.msra.mxu0 %v182
      %323 = vmatprep.subr.mxu0 0.0
      %324 = vmatpush1.msra.mxu0 0.0
      %325 = vmatprep.subr.mxu0 0.0
      %326 = vmatpush1.msra.mxu0 0.0
      %327 = vmatprep.subr.mxu0 0.0
      %328 = vmatpush1.msra.mxu0 0.0
      %329 = vmatprep.subr.mxu0 0.0
      %330 = vmatpush1.msra.mxu0 0.0
      %331 = vmatprep.subr.mxu0 0.0
      %332 = vmatpush1.msra.mxu0 0.0
      %333 = vmatprep.subr.mxu0 0.0
      %334 = vmatpush1.msra.mxu0 0.0
      %335 = vmatprep.subr.mxu0 0.0
      %336 = vmatpush1.msra.mxu0 0.0
      %337 = vmatprep.subr.mxu0 0.0
      %338 = vmatpush1.msra.mxu0 0.0
      %339 = vmatprep.subr.mxu0 0.0
      %340 = vmatpush1.msra.mxu0 0.0
      %341 = vmatprep.subr.mxu0 0.0
      %342 = vmatpush1.msra.mxu0 0.0
      %343 = vmatprep.subr.mxu0 0.0
      %344 = vmatpush1.msra.mxu0 0.0
      %345 = vmatprep.subr.mxu0 0.0
      %346 = vmatpush1.msra.mxu0 0.0
      %347 = vmatprep.subr.mxu0 0.0
      %348 = vmatpush1.msra.mxu0 0.0
      %349 = vmatprep.subr.mxu0 0.0
      %350 = vmatpush1.msra.mxu0 0.0
      %351 = vmatprep.subr.mxu0 0.0
      %352 = vmatpush1.msra.mxu0 0.0
      %353 = vmatprep.subr.mxu0 0.0
      %354 = vmatpush1.msra.mxu0 0.0
      %355 = vmatprep.subr.mxu0 0.0
      %356 = vmatpush1.msra.mxu0 0.0
      %357 = vmatprep.subr.mxu0 0.0
      %358 = vmatpush1.msra.mxu0 0.0
      %359 = vmatprep.subr.mxu0 0.0
      %360 = vmatpush1.msra.mxu0 0.0
      %361 = vmatprep.subr.mxu0 0.0
      %362 = vmatpush1.msra.mxu0 0.0
      %363 = vmatprep.subr.mxu0 0.0
      %364 = vmatpush1.msra.mxu0 0.0
      %365 = vmatprep.subr.mxu0 0.0
      %366 = vmatpush1.msra.mxu0 0.0
      %367 = vmatprep.subr.mxu0 0.0
      %368 = vmatpush1.msra.mxu0 0.0
      %369 = vmatprep.subr.mxu0 0.0
      %370 = vmatpush1.msra.mxu0 0.0
      %371 = vmatprep.subr.mxu0 0.0
      %372 = vmatpush1.msra.mxu0 0.0
      %373 = vmatprep.subr.mxu0 0.0
      %374 = vmatpush1.msra.mxu0 0.0
      %375 = vmatprep.subr.mxu0 0.0
      %376 = vmatpush1.msra.mxu0 0.0
      %377 = vmatprep.subr.mxu0 0.0
      %378 = vmatpush1.msra.mxu0 0.0
      %379 = vmatprep.subr.mxu0 0.0
      %380 = vmatpush1.msra.mxu0 0.0
      %381 = vmatprep.subr.mxu0 0.0
      %382 = vmatpush1.msra.mxu0 0.0
      %383 = vmatprep.mubr.f32.mxu0 0.0
      %384 = vmatmul.mubr.f32.gmra.mrb[0].mxu0 %v308
      %v385 = vpop.f32.mrb[0].mxu0
      %v386 = vadd.f32 %v289, %v385
      %v387 = vpop.f32.mrb[0].mxu0
      %388 = vmatprep.mubr.f32.mxu0 0.0
      %389 = vmatmul.mubr.f32.gmra.mrb[0].mxu0 %v311
      %v390 = vpop.f32.mrb[0].mxu0
      %v391 = vadd.f32 %v294, %v390
      %v392 = vpop.f32.mrb[0].mxu0
      %393 = vmatprep.mubr.f32.mxu0 0.0
      %394 = vmatmul.mubr.f32.gmra.mrb[0].mxu0 %v314
      %v395 = vpop.f32.mrb[0].mxu0
      %v396 = vadd.f32 %v299, %v395
      %v397 = vpop.f32.mrb[0].mxu0
      %398 = vmatprep.mubr.f32.mxu0 0.0
      %399 = vmatmul.mubr.f32.gmra.mrb[0].mxu0 %v317
      %v400 = vpop.f32.mrb[0].mxu0
      %v401 = vadd.f32 %v304, %v400
      %v402 = vpop.f32.mrb[0].mxu0
      %403 = vdwg.mxu0
      %s404 = scalar_lea.vmem %s1, 64
      %v405 = vld [vmem:[%s404] sm:$0xff]
      %v406 = vld [vmem:[%s404 + $0x8] sm:$0xff]
      %v407 = vld [vmem:[%s404 + $0x10] sm:$0xff]
      %v408 = vld [vmem:[%s404 + $0x18] sm:$0xff]
      %409 = vrot.lane.b32.xlu0 %v188, 118
      %v410 = vpop.permute.xlu0 %409
      %411 = vrot.lane.b32.xlu0 %v189, 118
      %v412 = vpop.permute.xlu0 %411
      %413 = vrot.lane.b32.xlu0 %v190, 118
      %v414 = vpop.permute.xlu0 %413
      %415 = vrot.lane.b32.xlu0 %v191, 118
      %v416 = vpop.permute.xlu0 %415
      %vm417 = vcmask 965632
      %v418 = vsel %vm417, %v410, %v412
      %v419 = vsel %vm417, %v414, %v416
      %v423 = vsel %vm209, %v405, 0
      %v426 = vsel %vm209, %v406, 0
      %v429 = vsel %vm209, %v407, 0
      %v432 = vsel %vm209, %v408, 0
      %434 = vmatprep.subr.mxu0 0.0
      %435 = vmatpush1.msra.mxu0 %v418
      %436 = vmatprep.subr.mxu0 0.0
      %437 = vmatpush1.msra.mxu0 %v419
      %438 = vmatprep.subr.mxu0 0.0
      %439 = vmatpush1.msra.mxu0 0.0
      %440 = vmatprep.subr.mxu0 0.0
      %441 = vmatpush1.msra.mxu0 0.0
      %442 = vmatprep.subr.mxu0 0.0
      %443 = vmatpush1.msra.mxu0 0.0
      %444 = vmatprep.subr.mxu0 0.0
      %445 = vmatpush1.msra.mxu0 0.0
      %446 = vmatprep.subr.mxu0 0.0
      %447 = vmatpush1.msra.mxu0 0.0
      %448 = vmatprep.subr.mxu0 0.0
      %449 = vmatpush1.msra.mxu0 0.0
      %450 = vmatprep.subr.mxu0 0.0
      %451 = vmatpush1.msra.mxu0 0.0
      %452 = vmatprep.subr.mxu0 0.0
      %453 = vmatpush1.msra.mxu0 0.0
      %454 = vmatprep.subr.mxu0 0.0
      %455 = vmatpush1.msra.mxu0 0.0
      %456 = vmatprep.subr.mxu0 0.0
      %457 = vmatpush1.msra.mxu0 0.0
      %458 = vmatprep.subr.mxu0 0.0
      %459 = vmatpush1.msra.mxu0 0.0
      %460 = vmatprep.subr.mxu0 0.0
      %461 = vmatpush1.msra.mxu0 0.0
      %462 = vmatprep.subr.mxu0 0.0
      %463 = vmatpush1.msra.mxu0 0.0
      %464 = vmatprep.subr.mxu0 0.0
      %465 = vmatpush1.msra.mxu0 0.0
      %466 = vmatprep.subr.mxu0 0.0
      %467 = vmatpush1.msra.mxu0 0.0
      %468 = vmatprep.subr.mxu0 0.0
      %469 = vmatpush1.msra.mxu0 0.0
      %470 = vmatprep.subr.mxu0 0.0
      %471 = vmatpush1.msra.mxu0 0.0
      %472 = vmatprep.subr.mxu0 0.0
      %473 = vmatpush1.msra.mxu0 0.0
      %474 = vmatprep.subr.mxu0 0.0
      %475 = vmatpush1.msra.mxu0 0.0
      %476 = vmatprep.subr.mxu0 0.0
      %477 = vmatpush1.msra.mxu0 0.0
      %478 = vmatprep.subr.mxu0 0.0
      %479 = vmatpush1.msra.mxu0 0.0
      %480 = vmatprep.subr.mxu0 0.0
      %481 = vmatpush1.msra.mxu0 0.0
      %482 = vmatprep.subr.mxu0 0.0
      %483 = vmatpush1.msra.mxu0 0.0
      %484 = vmatprep.subr.mxu0 0.0
      %485 = vmatpush1.msra.mxu0 0.0
      %486 = vmatprep.subr.mxu0 0.0
      %487 = vmatpush1.msra.mxu0 0.0
      %488 = vmatprep.subr.mxu0 0.0
      %489 = vmatpush1.msra.mxu0 0.0
      %490 = vmatprep.subr.mxu0 0.0
      %491 = vmatpush1.msra.mxu0 0.0
      %492 = vmatprep.subr.mxu0 0.0
      %493 = vmatpush1.msra.mxu0 0.0
      %494 = vmatprep.subr.mxu0 0.0
      %495 = vmatpush1.msra.mxu0 0.0
      %496 = vmatprep.subr.mxu0 0.0
      %497 = vmatpush1.msra.mxu0 0.0
      %498 = vmatprep.mubr.f32.mxu0 0.0
      %499 = vmatmul.mubr.f32.gmra.mrb[0].mxu0 %v423
      %v500 = vpop.f32.mrb[0].mxu0
      %v501 = vadd.f32 0.0, %v500
      %v502 = vpop.f32.mrb[0].mxu0
      %503 = vmatprep.mubr.f32.mxu0 0.0
      %504 = vmatmul.mubr.f32.gmra.mrb[0].mxu0 %v426
      %v505 = vpop.f32.mrb[0].mxu0
      %v506 = vadd.f32 0.0, %v505
      %v507 = vpop.f32.mrb[0].mxu0
      %508 = vmatprep.mubr.f32.mxu0 0.0
      %509 = vmatmul.mubr.f32.gmra.mrb[0].mxu0 %v429
      %v510 = vpop.f32.mrb[0].mxu0
      %v511 = vadd.f32 0.0, %v510
      %v512 = vpop.f32.mrb[0].mxu0
      %513 = vmatprep.mubr.f32.mxu0 0.0
      %514 = vmatmul.mubr.f32.gmra.mrb[0].mxu0 %v432
      %v515 = vpop.f32.mrb[0].mxu0
      %v516 = vadd.f32 0.0, %v515
      %v517 = vpop.f32.mrb[0].mxu0
      %518 = vdwg.mxu0
      %v519 = vadd.f32 %v386, %v501
      %v520 = vadd.f32 %v391, %v506
      %v521 = vadd.f32 %v396, %v511
      %v522 = vadd.f32 %v401, %v516
      %s523 = scalar_lea.vmem %s1, 96
      %v524 = vld [vmem:[%s523] sm:$0xff]
      %v525 = vld [vmem:[%s523 + $0x8] sm:$0xff]
      %v526 = vld [vmem:[%s523 + $0x10] sm:$0xff]
      %v527 = vld [vmem:[%s523 + $0x18] sm:$0xff]
      %528 = vrot.lane.b32.xlu0 %v188, 117
      %v529 = vpop.permute.xlu0 %528
      %530 = vrot.lane.b32.xlu0 %v189, 117
      %v531 = vpop.permute.xlu0 %530
      %532 = vrot.lane.b32.xlu0 %v190, 117
      %v533 = vpop.permute.xlu0 %532
      %534 = vrot.lane.b32.xlu0 %v191, 117
      %v535 = vpop.permute.xlu0 %534
      %vm536 = vcmask 957440
      %v537 = vsel %vm536, %v529, %v531
      %v538 = vsel %vm536, %v533, %v535
      %v542 = vsel %vm209, %v524, 0
      %v545 = vsel %vm209, %v525, 0
      %v548 = vsel %vm209, %v526, 0
      %v551 = vsel %vm209, %v527, 0
      %553 = vmatprep.subr.mxu0 0.0
      %554 = vmatpush1.msra.mxu0 %v537
      %555 = vmatprep.subr.mxu0 0.0
      %556 = vmatpush1.msra.mxu0 %v538
      %557 = vmatprep.subr.mxu0 0.0
      %558 = vmatpush1.msra.mxu0 0.0
      %559 = vmatprep.subr.mxu0 0.0
      %560 = vmatpush1.msra.mxu0 0.0
      %561 = vmatprep.subr.mxu0 0.0
      %562 = vmatpush1.msra.mxu0 0.0
      %563 = vmatprep.subr.mxu0 0.0
      %564 = vmatpush1.msra.mxu0 0.0
      %565 = vmatprep.subr.mxu0 0.0
      %566 = vmatpush1.msra.mxu0 0.0
      %567 = vmatprep.subr.mxu0 0.0
      %568 = vmatpush1.msra.mxu0 0.0
      %569 = vmatprep.subr.mxu0 0.0
      %570 = vmatpush1.msra.mxu0 0.0
      %571 = vmatprep.subr.mxu0 0.0
      %572 = vmatpush1.msra.mxu0 0.0
      %573 = vmatprep.subr.mxu0 0.0
      %574 = vmatpush1.msra.mxu0 0.0
      %575 = vmatprep.subr.mxu0 0.0
      %576 = vmatpush1.msra.mxu0 0.0
      %577 = vmatprep.subr.mxu0 0.0
      %578 = vmatpush1.msra.mxu0 0.0
      %579 = vmatprep.subr.mxu0 0.0
      %580 = vmatpush1.msra.mxu0 0.0
      %581 = vmatprep.subr.mxu0 0.0
      %582 = vmatpush1.msra.mxu0 0.0
      %583 = vmatprep.subr.mxu0 0.0
      %584 = vmatpush1.msra.mxu0 0.0
      %585 = vmatprep.subr.mxu0 0.0
      %586 = vmatpush1.msra.mxu0 0.0
      %587 = vmatprep.subr.mxu0 0.0
      %588 = vmatpush1.msra.mxu0 0.0
      %589 = vmatprep.subr.mxu0 0.0
      %590 = vmatpush1.msra.mxu0 0.0
      %591 = vmatprep.subr.mxu0 0.0
      %592 = vmatpush1.msra.mxu0 0.0
      %593 = vmatprep.subr.mxu0 0.0
      %594 = vmatpush1.msra.mxu0 0.0
      %595 = vmatprep.subr.mxu0 0.0
      %596 = vmatpush1.msra.mxu0 0.0
      %597 = vmatprep.subr.mxu0 0.0
      %598 = vmatpush1.msra.mxu0 0.0
      %599 = vmatprep.subr.mxu0 0.0
      %600 = vmatpush1.msra.mxu0 0.0
      %601 = vmatprep.subr.mxu0 0.0
      %602 = vmatpush1.msra.mxu0 0.0
      %603 = vmatprep.subr.mxu0 0.0
      %604 = vmatpush1.msra.mxu0 0.0
      %605 = vmatprep.subr.mxu0 0.0
      %606 = vmatpush1.msra.mxu0 0.0
      %607 = vmatprep.subr.mxu0 0.0
      %608 = vmatpush1.msra.mxu0 0.0
      %609 = vmatprep.subr.mxu0 0.0
      %610 = vmatpush1.msra.mxu0 0.0
      %611 = vmatprep.subr.mxu0 0.0
      %612 = vmatpush1.msra.mxu0 0.0
      %613 = vmatprep.subr.mxu0 0.0
      %614 = vmatpush1.msra.mxu0 0.0
      %615 = vmatprep.subr.mxu0 0.0
      %616 = vmatpush1.msra.mxu0 0.0
      %617 = vmatprep.mubr.f32.mxu0 0.0
      %618 = vmatmul.mubr.f32.gmra.mrb[0].mxu0 %v542
      %v619 = vpop.f32.mrb[0].mxu0
      %v620 = vadd.f32 0.0, %v619
      %v621 = vpop.f32.mrb[0].mxu0
      %622 = vmatprep.mubr.f32.mxu0 0.0
      %623 = vmatmul.mubr.f32.gmra.mrb[0].mxu0 %v545
      %v624 = vpop.f32.mrb[0].mxu0
      %v625 = vadd.f32 0.0, %v624
      %v626 = vpop.f32.mrb[0].mxu0
      %627 = vmatprep.mubr.f32.mxu0 0.0
      %628 = vmatmul.mubr.f32.gmra.mrb[0].mxu0 %v548
      %v629 = vpop.f32.mrb[0].mxu0
      %v630 = vadd.f32 0.0, %v629
      %v631 = vpop.f32.mrb[0].mxu0
      %632 = vmatprep.mubr.f32.mxu0 0.0
      %633 = vmatmul.mubr.f32.gmra.mrb[0].mxu0 %v551
      %v634 = vpop.f32.mrb[0].mxu0
      %v635 = vadd.f32 0.0, %v634
      %v636 = vpop.f32.mrb[0].mxu0
      %637 = vdwg.mxu0
      %v638 = vadd.f32 %v519, %v620
      %v639 = vadd.f32 %v520, %v625
      %v640 = vadd.f32 %v521, %v630
      %v641 = vadd.f32 %v522, %v635
      %v642 = vld [vmem:[%s2] sm:$0xff]
      %v643 = vld [vmem:[%s2 + $0x8] sm:$0xff]
      %v644 = vld [vmem:[%s2 + $0x10] sm:$0xff]
      %v645 = vld [vmem:[%s2 + $0x18] sm:$0xff]
      %647 = vset.pattern.permute.xlu0 0
      %648 = vperm.xlu0 %647, %v642
      %v649 = vpop.permute.xlu0 %648
      %652 = vset.pattern.permute.xlu0 0
      %653 = vperm.xlu0 %652, %v643
      %v654 = vpop.permute.xlu0 %653
      %657 = vset.pattern.permute.xlu0 0
      %658 = vperm.xlu0 %657, %v644
      %v659 = vpop.permute.xlu0 %658
      %662 = vset.pattern.permute.xlu0 0
      %663 = vperm.xlu0 %662, %v645
      %v664 = vpop.permute.xlu0 %663
      %v666 = vadd.f32 %v638, %v649
      %v667 = vadd.f32 %v639, %v654
      %v668 = vadd.f32 %v640, %v659
      %v669 = vadd.f32 %v641, %v664
      %v670 = vmax.f32 %v666, 0.0
      %v671 = vmax.f32 %v667, 0.0
      %v672 = vmax.f32 %v668, 0.0
      %v673 = vmax.f32 %v669, 0.0
      %674 = vst [vmem:[%s175] sm:$0xff] %v670
      %675 = vst [vmem:[%s175 + $0x8] sm:$0xff] %v671
      %676 = vst [vmem:[%s175 + $0x10] sm:$0xff] %v672
      %677 = vst [vmem:[%s175 + $0x18] sm:$0xff] %v673
      %s678 = smul.u32 4, %s14
      %p679 = scmp.lt.s32.totalorder %s678, 7
      %s680 = scalar_select %p679, %s678, 7
      %s681 = smul.addr %s680, 8
      %s682 = scalar_lea.vmem %s3, %s681
      // Predicated region
      $region33: #{mnasnet_stem.1} parent=31 // pred_check
        %p683 = pneg %p100
      $region34: #{mnasnet_stem.1} parent=31 // pred_check_branch
        %685 = sbr.rel (%p683) target = $region36
      $region35: #{mnasnet_stem.1} parent=31 // pred_region
        %s686 = smul.u32 4, %s14
      $region36: #{mnasnet_stem.1} parent=31 // pred_fallthru
        _
    $region32: #{mnasnet_stem.1} parent=5 // pred_fallthru
      _
    %p687 = scmp.le.s32.totalorder 2, %s9
    // Predicated region
    $region37: #{mnasnet_stem.1} parent=5 // pred_check
      %p688 = pneg %p687
    $region38: #{mnasnet_stem.1} parent=5 // pred_check_branch
      %690 = sbr.rel (%p688) target = $region40
    $region39: #{mnasnet_stem.1} parent=5 // pred_region
      %s691 = ssub.s32 %s9, 2
      // Predicated region
      $region41: #{mnasnet_stem.1} parent=39 // pred_check
        %p692 = pneg %p106
      $region42: #{mnasnet_stem.1} parent=39 // pred_check_branch
        %694 = sbr.rel (%p692) target = $region44
      $region43: #{mnasnet_stem.1} parent=39 // pred_region
        %s695 = smul.u32 4, %s15
        %p696 = scmp.lt.s32.totalorder %s695, 7
        %s697 = scalar_select %p696, %s695, 7
        %s698 = smul.addr %s697, 8
        %s699 = scalar_lea.vmem %s3, %s698
      $region44: #{mnasnet_stem.1} parent=39 // pred_fallthru
        _
    $region40: #{mnasnet_stem.1} parent=5 // pred_fallthru
      _
  $region6: #{mnasnet_stem.1} parent=0 // loop_footer
    %s13 = sadd.s32 1, %s9
  $region7: #{mnasnet_stem.1} parent=0 // loop_footer_branch
    %8 = sbr.rel target = $region3
  $region8: #{mnasnet_stem.1} parent=0 // loop_exit
    _

</llo_original>
